<compile_context>
chip_gen: v7x
topology: tpu7x:2x2x1
jax: 0.10.0
libtpu: 0.0.40
codegen_flags: <defaults>
</compile_context>

<pallas_src>
import jax
import jax.numpy as jnp
from jax import lax
from jax.experimental import pallas as pl
from jax.experimental.pallas import tpu as pltpu


def _pick_tile(dim, candidates=(512, 256, 128)):
    """Largest lane-friendly tile that evenly divides `dim`, else the full dim."""
    for c in candidates:
        if dim % c == 0:
            return c
    return dim


def skip_linear_kernel(x_ref, w_ref, xs_ref, b_ref, o_ref, acc_ref):
    # x_ref : (tm, tk)  input rows, K-slice           (matmul operand)
    # w_ref : (tn, tk)  PyTorch-layout weight tile    (out_features, in_features)
    # xs_ref: (tm, tn)  input rows, N-column slice    (skip-connection operand)
    # b_ref : (1,  tn)  bias slice
    # o_ref : (tm, tn)  output tile
    # acc_ref: (tm, tn) f32 accumulator (scratch, resident across K steps)
    k = pl.program_id(2)

    @pl.when(k == 0)
    def _():
        acc_ref[...] = jnp.zeros_like(acc_ref)

    # Contract x's last dim against w's last dim => x @ W^T, no HBM transpose.
    # Native-dtype operands into the MXU, f32 accumulation.
    acc_ref[...] += lax.dot_general(
        x_ref[...], w_ref[...],
        dimension_numbers=(((1,), (1,)), ((), ())),
        preferred_element_type=jnp.float32)

    @pl.when(k == pl.num_programs(2) - 1)
    def _():
        y = acc_ref[...] + b_ref[...].astype(jnp.float32)
        o_ref[...] = (xs_ref[...].astype(jnp.float32) + y).astype(o_ref.dtype)


def skip_connection_linear(x, w, b, *, tm=256):
    """out = x + (x @ w.T + b).

    x: (batch, seq, hidden); w: (hidden, hidden) in PyTorch (out, in) layout;
    b: (hidden,).
    """
    batch, seq, hidden = x.shape
    M = batch * seq

    x2 = x.reshape(M, hidden)
    b2 = b.reshape(1, hidden)

    # Row tile: multiple of 8 (sublane), capped at tm; pad M to a multiple of it.
    tm_eff = min(tm, ((M + 7) // 8) * 8)
    M_pad = ((M + tm_eff - 1) // tm_eff) * tm_eff
    if M_pad != M:
        x2 = jnp.pad(x2, ((0, M_pad - M), (0, 0)))

    # Column / reduction tiles: lane-dense multiples of 128 when possible.
    tn = _pick_tile(hidden)
    tk = _pick_tile(hidden)

    grid = (M_pad // tm_eff, hidden // tn, hidden // tk)

    itemsize = jnp.dtype(x.dtype).itemsize
    cost = pl.CostEstimate(
        flops=2 * M_pad * hidden * hidden + 2 * M_pad * hidden,
        transcendentals=0,
        bytes_accessed=int(2 * M_pad * hidden * itemsize          # x (matmul + skip reads)
                           + hidden * hidden * jnp.dtype(w.dtype).itemsize
                           + hidden * jnp.dtype(b.dtype).itemsize
                           + M_pad * hidden * itemsize),          # out
    )

    out2 = pl.pallas_call(
        skip_linear_kernel,
        out_shape=jax.ShapeDtypeStruct((M_pad, hidden), x.dtype),
        grid_spec=pltpu.PrefetchScalarGridSpec(
            num_scalar_prefetch=0,
            grid=grid,
            in_specs=[
                # x rows, K-slice for the matmul
                pl.BlockSpec((tm_eff, tk), lambda i, j, k: (i, k)),
                # weight tile (out, in) layout: (tn rows of W, tk columns)
                pl.BlockSpec((tn, tk), lambda i, j, k: (j, k)),
                # x rows, N-column slice for the skip add (k-invariant -> stays resident)
                pl.BlockSpec((tm_eff, tn), lambda i, j, k: (i, j)),
                # bias slice
                pl.BlockSpec((1, tn), lambda i, j, k: (0, j)),
            ],
            out_specs=pl.BlockSpec((tm_eff, tn), lambda i, j, k: (i, j)),
            scratch_shapes=[pltpu.VMEM((tm_eff, tn), jnp.float32)],
        ),
        compiler_params=pltpu.CompilerParams(
            dimension_semantics=("parallel", "parallel", "arbitrary"),
            vmem_limit_bytes=32 * 1024 * 1024,
        ),
        cost_estimate=cost,
    )(x2, w, x2, b2)

    return out2[:M].reshape(batch, seq, hidden)


if __name__ == "__main__":
    key = jax.random.PRNGKey(0)
    k_x, k_w, k_b = jax.random.split(key, 3)

    batch, seq, hidden = 2, 8, 32

    x = jax.random.normal(k_x, (batch, seq, hidden), dtype=jnp.float32)
    # PyTorch Linear-style uniform init, bound = 1/sqrt(fan_in)
    bound = 1.0 / (hidden ** 0.5)
    w = jax.random.uniform(k_w, (hidden, hidden), dtype=jnp.float32,
                           minval=-bound, maxval=bound)
    b = jax.random.uniform(k_b, (hidden,), dtype=jnp.float32,
                           minval=-bound, maxval=bound)

    out = skip_connection_linear(x, w, b)
    out = jax.block_until_ready(out)

    # Reference: same semantics as PyTorch SkipConnection(nn.Linear): x + (x @ W^T + b)
    ref = x + (jnp.einsum("bsh,oh->bso", x, w) + b)
    assert out.shape == (batch, seq, hidden)
    assert jnp.allclose(out, ref, atol=1e-5, rtol=1e-5)

    print("KERNEL_OK")
</pallas_src>

<mosaic_0001>
module attributes {stable_mosaic.version = 11 : i64} {
  func.func @skip_linear_kernel(%arg0: i32, %arg1: i32, %arg2: i32, %arg3: memref<16x32xf32, #tpu.memory_space<vmem>>, %arg4: memref<32x32xf32, #tpu.memory_space<vmem>>, %arg5: memref<16x32xf32, #tpu.memory_space<vmem>>, %arg6: memref<1x32xf32, #tpu.memory_space<vmem>>, %arg7: memref<16x32xf32, #tpu.memory_space<vmem>>, %arg8: memref<16x32xf32, #tpu.memory_space<vmem>>) attributes {dimension_semantics = [#tpu.dimension_semantics<parallel>, #tpu.dimension_semantics<parallel>, #tpu.dimension_semantics<arbitrary>], iteration_bounds = array<i64: 1, 1, 1>, scalar_prefetch = 0 : i64, scratch_operands = 1 : i64, tpu.core_type = #tpu.core_type<tc>, window_params = [{transform_indices = @transform_0, window_bounds = array<i64: 16, 32>}, {transform_indices = @transform_1, window_bounds = array<i64: 32, 32>}, {transform_indices = @transform_2, window_bounds = array<i64: 16, 32>}, {transform_indices = @transform_3, window_bounds = array<i64: 1, 32>}, {transform_indices = @transform_4, window_bounds = array<i64: 16, 32>}]} {
    %c0_i32 = arith.constant 0 : i32
    %0 = arith.cmpi eq, %arg2, %c0_i32 : i32
    %1 = arith.extui %0 : i1 to i32
    %c0_i32_0 = arith.constant 0 : i32
    %2 = arith.cmpi ne, %1, %c0_i32_0 : i32
    scf.if %2 {
      %cst_10 = arith.constant 0.000000e+00 : f32
      %12 = vector.broadcast %cst_10 : f32 to vector<16x32xf32>
      %c0_11 = arith.constant 0 : index
      %c0_12 = arith.constant 0 : index
      %13 = vector.load %arg8[%c0_11, %c0_12] : memref<16x32xf32, #tpu.memory_space<vmem>>, vector<16x32xf32>
      tpu.vector_store %arg8[%c0_11, %c0_12], %12 {strides = array<i32>} : memref<16x32xf32, #tpu.memory_space<vmem>>, vector<16x32xf32>,
    } else {
    }
    %c0 = arith.constant 0 : index
    %c0_1 = arith.constant 0 : index
    %3 = vector.load %arg8[%c0, %c0_1] : memref<16x32xf32, #tpu.memory_space<vmem>>, vector<16x32xf32>
    %c0_2 = arith.constant 0 : index
    %c0_3 = arith.constant 0 : index
    %4 = vector.load %arg3[%c0_2, %c0_3] : memref<16x32xf32, #tpu.memory_space<vmem>>, vector<16x32xf32>
    %c0_4 = arith.constant 0 : index
    %c0_5 = arith.constant 0 : index
    %5 = vector.load %arg4[%c0_4, %c0_5] : memref<32x32xf32, #tpu.memory_space<vmem>>, vector<32x32xf32>
    %cst = arith.constant dense<0.000000e+00> : vector<16x32xf32>
    %6 = tpu.matmul %4, %5, %cst {dimension_numbers = #tpu.dot_dimension_numbers<[1], [1], [0], [0], [0, 0, 1, 0], [], []>} : vector<16x32xf32>, vector<32x32xf32>, vector<16x32xf32> -> vector<16x32xf32>
    %7 = arith.addf %3, %6 : vector<16x32xf32>
    %c0_6 = arith.constant 0 : index
    %c0_7 = arith.constant 0 : index
    %8 = vector.load %arg8[%c0_6, %c0_7] : memref<16x32xf32, #tpu.memory_space<vmem>>, vector<16x32xf32>
    tpu.vector_store %arg8[%c0_6, %c0_7], %7 {strides = array<i32>} : memref<16x32xf32, #tpu.memory_space<vmem>>, vector<16x32xf32>,
    %c0_i32_8 = arith.constant 0 : i32
    %9 = arith.cmpi eq, %arg2, %c0_i32_8 : i32
    %10 = arith.extui %9 : i1 to i32
    %c0_i32_9 = arith.constant 0 : i32
    %11 = arith.cmpi ne, %10, %c0_i32_9 : i32
    scf.if %11 {
      %c0_10 = arith.constant 0 : index
      %c0_11 = arith.constant 0 : index
      %12 = vector.load %arg8[%c0_10, %c0_11] : memref<16x32xf32, #tpu.memory_space<vmem>>, vector<16x32xf32>
      %c0_12 = arith.constant 0 : index
      %c0_13 = arith.constant 0 : index
      %13 = vector.load %arg6[%c0_12, %c0_13] : memref<1x32xf32, #tpu.memory_space<vmem>>, vector<1x32xf32>
      %14 = vector.broadcast %13 : vector<1x32xf32> to vector<16x32xf32>
      %15 = arith.addf %12, %14 : vector<16x32xf32>
      %c0_14 = arith.constant 0 : index
      %c0_15 = arith.constant 0 : index
      %16 = vector.load %arg5[%c0_14, %c0_15] : memref<16x32xf32, #tpu.memory_space<vmem>>, vector<16x32xf32>
      %17 = arith.addf %16, %15 : vector<16x32xf32>
      %c0_16 = arith.constant 0 : index
      %c0_17 = arith.constant 0 : index
      %18 = vector.load %arg7[%c0_16, %c0_17] : memref<16x32xf32, #tpu.memory_space<vmem>>, vector<16x32xf32>
      tpu.vector_store %arg7[%c0_16, %c0_17], %17 {strides = array<i32>} : memref<16x32xf32, #tpu.memory_space<vmem>>, vector<16x32xf32>,
    } else {
    }
    return
  }
  func.func @transform_0(%arg0: i32, %arg1: i32, %arg2: i32) -> (i32, i32) {
    %c0_i32 = arith.constant 0 : i32
    return %arg0, %arg2 : i32, i32
  }
  func.func @transform_1(%arg0: i32, %arg1: i32, %arg2: i32) -> (i32, i32) {
    %c0_i32 = arith.constant 0 : i32
    return %arg1, %arg2 : i32, i32
  }
  func.func @transform_2(%arg0: i32, %arg1: i32, %arg2: i32) -> (i32, i32) {
    %c0_i32 = arith.constant 0 : i32
    return %arg0, %arg1 : i32, i32
  }
  func.func @transform_3(%arg0: i32, %arg1: i32, %arg2: i32) -> (i32, i32) {
    %c0_i32 = arith.constant 0 : i32
    %c0_i32_0 = arith.constant 0 : i32
    return %c0_i32, %arg1 : i32, i32
  }
  func.func @transform_4(%arg0: i32, %arg1: i32, %arg2: i32) -> (i32, i32) {
    %c0_i32 = arith.constant 0 : i32
    return %arg0, %arg1 : i32, i32
  }
}

</mosaic_0001>

<llo_original>
// kernel: tpu_custom_call.1
$region0: #{tpu_custom_call.1}
  #allocation0 [shape = 'u32[]', space=smem, size = 0x4, offset = 0x4, fixed_abs, tag = 'smem constant byte address 0x4 - core index']
  #allocation1 [shape = 'u32[144,128]{1,0:T(1,128)}', space=vmem, size = 0x12000, scoped, tag = 'internal scratch']
  #allocation2 [shape = 'f32[16,32]{1,0:T(8,128)}', space=vmem, size = 0x2000, scoped, tag = 'scratch operand']
  %s0 = inlined_call_operand.hbm [shape: f32[16,32], index: 0, kind: input, shape index: {}]
  %s1 = inlined_call_operand.hbm [shape: f32[32,32], index: 1, kind: input, shape index: {}]
  %s2 = inlined_call_operand.hbm [shape: f32[16,32], index: 2, kind: input, shape index: {}]
  %s3 = inlined_call_operand.vmem [shape: f32[1,32], index: 3, kind: input, shape index: {}]
  %s4 = inlined_call_operand.hbm [shape: f32[16,32], index: 4, kind: output, shape index: {}]
  %s5 = sld [smem:[#allocation0]]
  $region46: #{tpu_custom_call.1} parent=0
    _
  %s7 = ssub.s32 1, %s5
  %s8 = scalar_select 0, %s7, %s5
  $region1: #{tpu_custom_call.1} parent=0
    #allocation3 [shape = 'u8[8192]{0}', space=vmem, size = 0x2000, scoped, tag = 'input window, operand 0, single buffered']
    #allocation4 [shape = 's32[1]{0}', space=sflag, size = 0x4, scoped, tag = 'scoped memory for tpu_custom_call.1']
    #allocation5 [shape = 's32[1]{0}', space=sflag, size = 0x4, scoped, tag = 'scoped memory for tpu_custom_call.1']
    #allocation6 [shape = 'u8[16384]{0}', space=vmem, size = 0x4000, scoped, tag = 'input window, operand 1, single buffered']
    #allocation7 [shape = 's32[1]{0}', space=sflag, size = 0x4, scoped, tag = 'scoped memory for tpu_custom_call.1']
    #allocation8 [shape = 'u8[8192]{0}', space=vmem, size = 0x2000, scoped, tag = 'input window, operand 2, single buffered']
    #allocation9 [shape = 'u8[8192]{0}', space=vmem, size = 0x2000, scoped, tag = 'output window, operand 0, single buffered']
    %9 = vsyncpa [#allocation4], 0
    %10 = vsyncpa [#allocation7], 0
    %11 = vsyncpa [#allocation5], 0
    // Predicated region
    $region2: #{tpu_custom_call.1} parent=1 // pred_check
      _
    $region3: #{tpu_custom_call.1} parent=1 // pred_check_branch
      %13 = sbr.rel (0) target = $region5
    $region4: #{tpu_custom_call.1} parent=1 // pred_region
      %s15 = ssub.s32 256, 256
      %16 = vsyncadd [#allocation4], %s15
      %s17 = sshll.u32 [#allocation3], 4
      %s18 = int_to_ptr.vmem [resolvable:$true] %s17
      %23 = dma.hbm_to_vmem [thread:$0]  %s0, 256, %s18, [#allocation4], 128, 128, 8
    $region5: #{tpu_custom_call.1} parent=1 // pred_fallthru
      _
    // Predicated region
    $region6: #{tpu_custom_call.1} parent=1 // pred_check
      _
    $region7: #{tpu_custom_call.1} parent=1 // pred_check_branch
      %25 = sbr.rel (0) target = $region9
    $region8: #{tpu_custom_call.1} parent=1 // pred_region
      %s27 = ssub.s32 512, 512
      %28 = vsyncadd [#allocation7], %s27
      %s29 = sshll.u32 [#allocation6], 4
      %s30 = int_to_ptr.vmem [resolvable:$true] %s29
      %35 = dma.hbm_to_vmem [thread:$0]  %s1, 512, %s30, [#allocation7], 128, 128, 8
    $region9: #{tpu_custom_call.1} parent=1 // pred_fallthru
      _
    // Predicated region
    $region10: #{tpu_custom_call.1} parent=1 // pred_check
      _
    $region11: #{tpu_custom_call.1} parent=1 // pred_check_branch
      %37 = sbr.rel (0) target = $region13
    $region12: #{tpu_custom_call.1} parent=1 // pred_region
      %s39 = ssub.s32 256, 256
      %40 = vsyncadd [#allocation7], %s39
      %s41 = sshll.u32 [#allocation8], 4
      %s42 = int_to_ptr.vmem [resolvable:$true] %s41
      %47 = dma.hbm_to_vmem [thread:$0]  %s2, 256, %s42, [#allocation7], 128, 128, 8
    $region13: #{tpu_custom_call.1} parent=1 // pred_fallthru
      _
    // Predicated region
    $region14: #{tpu_custom_call.1} parent=1 // pred_check
      _
    $region15: #{tpu_custom_call.1} parent=1 // pred_check_branch
      %49 = sbr.rel (0) target = $region17
    $region16: #{tpu_custom_call.1} parent=1 // pred_region
      _
    $region17: #{tpu_custom_call.1} parent=1 // pred_fallthru
      _
    // Predicated region
    $region18: #{tpu_custom_call.1} parent=1 // pred_check
      _
    $region19: #{tpu_custom_call.1} parent=1 // pred_check_branch
      %51 = sbr.rel (0) target = $region21
    $region20: #{tpu_custom_call.1} parent=1 // pred_region
      %52 = dma.done [#allocation4], 256
    $region21: #{tpu_custom_call.1} parent=1 // pred_fallthru
      _
    // Predicated region
    $region22: #{tpu_custom_call.1} parent=1 // pred_check
      _
    $region23: #{tpu_custom_call.1} parent=1 // pred_check_branch
      %54 = sbr.rel (0) target = $region25
    $region24: #{tpu_custom_call.1} parent=1 // pred_region
      %55 = dma.done [#allocation7], 512
    $region25: #{tpu_custom_call.1} parent=1 // pred_fallthru
      _
    // Predicated region
    $region26: #{tpu_custom_call.1} parent=1 // pred_check
      _
    $region27: #{tpu_custom_call.1} parent=1 // pred_check_branch
      %57 = sbr.rel (0) target = $region29
    $region28: #{tpu_custom_call.1} parent=1 // pred_region
      %58 = dma.done [#allocation7], 256
    $region29: #{tpu_custom_call.1} parent=1 // pred_fallthru
      _
    %p59 = scmp.eq.s32.totalorder 0, 0
    // Predicated region
    $region30: #{tpu_custom_call.1} parent=1 // pred_check
      %p60 = pneg %p59
    $region31: #{tpu_custom_call.1} parent=1 // pred_check_branch
      %62 = sbr.rel (%p60) target = $region33
    $region32: #{tpu_custom_call.1} parent=1 // pred_region
      %vm63 = vcmask 261120
      %64 = vst.msk [vmem:[#allocation2] sm:$0xff] %vm63, 0.0
      %65 = vst.msk [vmem:[#allocation2 + $0x8] sm:$0xff] %vm63, 0.0
    $region33: #{tpu_custom_call.1} parent=1 // pred_fallthru
      _
    %v66 = vld [vmem:[#allocation2] sm:$0xff]
    %v67 = vld [vmem:[#allocation2 + $0x8] sm:$0xff]
    %v68 = vld [vmem:[#allocation3] sm:$0xff]
    %v69 = vld [vmem:[#allocation3 + $0x8] sm:$0xff]
    %v70 = vld [vmem:[#allocation6] sm:$0xff]
    %v71 = vld [vmem:[#allocation6 + $0x8] sm:$0xff]
    %v72 = vld [vmem:[#allocation6 + $0x10] sm:$0xff]
    %v73 = vld [vmem:[#allocation6 + $0x18] sm:$0xff]
    %vm74 = vcmask 261120
    %v76 = vsel %vm74, %v68, 0
    %v79 = vsel %vm74, %v69, 0
    %v82 = vsel %vm74, %v70, 0
    %v85 = vsel %vm74, %v71, 0
    %v88 = vsel %vm74, %v72, 0
    %v91 = vsel %vm74, %v73, 0
    %93 = vmatprep.subr.mxu0 0.0
    %94 = vmatpush1.xpose.msra.mxu0 %v82
    %95 = vmatprep.subr.mxu0 0.0
    %96 = vmatpush1.xpose.msra.mxu0 %v85
    %97 = vmatprep.subr.mxu0 0.0
    %98 = vmatpush1.xpose.msra.mxu0 %v88
    %99 = vmatprep.subr.mxu0 0.0
    %100 = vmatpush1.xpose.msra.mxu0 %v91
    %101 = vmatprep.subr.mxu0 0.0
    %102 = vmatpush1.xpose.msra.mxu0 0.0
    %103 = vmatprep.subr.mxu0 0.0
    %104 = vmatpush1.xpose.msra.mxu0 0.0
    %105 = vmatprep.subr.mxu0 0.0
    %106 = vmatpush1.xpose.msra.mxu0 0.0
    %107 = vmatprep.subr.mxu0 0.0
    %108 = vmatpush1.xpose.msra.mxu0 0.0
    %109 = vmatprep.subr.mxu0 0.0
    %110 = vmatpush1.xpose.msra.mxu0 0.0
    %111 = vmatprep.subr.mxu0 0.0
    %112 = vmatpush1.xpose.msra.mxu0 0.0
    %113 = vmatprep.subr.mxu0 0.0
    %114 = vmatpush1.xpose.msra.mxu0 0.0
    %115 = vmatprep.subr.mxu0 0.0
    %116 = vmatpush1.xpose.msra.mxu0 0.0
    %117 = vmatprep.subr.mxu0 0.0
    %118 = vmatpush1.xpose.msra.mxu0 0.0
    %119 = vmatprep.subr.mxu0 0.0
    %120 = vmatpush1.xpose.msra.mxu0 0.0
    %121 = vmatprep.subr.mxu0 0.0
    %122 = vmatpush1.xpose.msra.mxu0 0.0
    %123 = vmatprep.subr.mxu0 0.0
    %124 = vmatpush1.xpose.msra.mxu0 0.0
    %125 = vmatprep.subr.mxu0 0.0
    %126 = vmatpush1.xpose.msra.mxu0 0.0
    %127 = vmatprep.subr.mxu0 0.0
    %128 = vmatpush1.xpose.msra.mxu0 0.0
    %129 = vmatprep.subr.mxu0 0.0
    %130 = vmatpush1.xpose.msra.mxu0 0.0
    %131 = vmatprep.subr.mxu0 0.0
    %132 = vmatpush1.xpose.msra.mxu0 0.0
    %133 = vmatprep.subr.mxu0 0.0
    %134 = vmatpush1.xpose.msra.mxu0 0.0
    %135 = vmatprep.subr.mxu0 0.0
    %136 = vmatpush1.xpose.msra.mxu0 0.0
    %137 = vmatprep.subr.mxu0 0.0
    %138 = vmatpush1.xpose.msra.mxu0 0.0
    %139 = vmatprep.subr.mxu0 0.0
    %140 = vmatpush1.xpose.msra.mxu0 0.0
    %141 = vmatprep.subr.mxu0 0.0
    %142 = vmatpush1.xpose.msra.mxu0 0.0
    %143 = vmatprep.subr.mxu0 0.0
    %144 = vmatpush1.xpose.msra.mxu0 0.0
    %145 = vmatprep.subr.mxu0 0.0
    %146 = vmatpush1.xpose.msra.mxu0 0.0
    %147 = vmatprep.subr.mxu0 0.0
    %148 = vmatpush1.xpose.msra.mxu0 0.0
    %149 = vmatprep.subr.mxu0 0.0
    %150 = vmatpush1.xpose.msra.mxu0 0.0
    %151 = vmatprep.subr.mxu0 0.0
    %152 = vmatpush1.xpose.msra.mxu0 0.0
    %153 = vmatprep.subr.mxu0 0.0
    %154 = vmatpush1.xpose.msra.mxu0 0.0
    %155 = vmatprep.subr.mxu0 0.0
    %156 = vmatpush1.xpose.msra.mxu0 0.0
    %157 = vmatprep.mubr.f32.mxu0 0.0
    %158 = vmatmul.mubr.f32.gmra.mrb[0].mxu0 %v76
    %v159 = vpop.f32.mrb[0].mxu0
    %v160 = vadd.f32 0.0, %v159
    %v161 = vpop.f32.mrb[0].mxu0
    %162 = vmatprep.mubr.f32.mxu0 0.0
    %163 = vmatmul.mubr.f32.gmra.mrb[0].mxu0 %v79
    %v164 = vpop.f32.mrb[0].mxu0
    %v165 = vadd.f32 0.0, %v164
    %v166 = vpop.f32.mrb[0].mxu0
    %167 = vdwg.mxu0
    %v168 = vadd.f32 %v66, %v160
    %v169 = vadd.f32 %v67, %v165
    %170 = vst.msk [vmem:[#allocation2] sm:$0xff] %vm74, %v168
    %171 = vst.msk [vmem:[#allocation2 + $0x8] sm:$0xff] %vm74, %v169
    // Predicated region
    $region34: #{tpu_custom_call.1} parent=1 // pred_check
      %p172 = pneg %p59
    $region35: #{tpu_custom_call.1} parent=1 // pred_check_branch
      %174 = sbr.rel (%p172) target = $region37
    $region36: #{tpu_custom_call.1} parent=1 // pred_region
      %v175 = vld [vmem:[#allocation2] sm:$0xff]
      %v176 = vld [vmem:[#allocation2 + $0x8] sm:$0xff]
      %v177 = vld [vmem:[%s3] sm:$0x1]
      %v179 = vlaneseq
      %v180 = vshrl.u32 %v179, 7
      %v181 = vsub.s32 0, %v180
      %v182 = vrot.slane %v177, %v181
      %v184 = vadd.f32 %v175, %v182
      %v185 = vadd.f32 %v176, %v182
      %v186 = vld [vmem:[#allocation8] sm:$0xff]
      %v187 = vld [vmem:[#allocation8 + $0x8] sm:$0xff]
      %v188 = vadd.f32 %v186, %v184
      %v189 = vadd.f32 %v187, %v185
      %190 = vst.msk [vmem:[#allocation9] sm:$0xff] %vm74, %v188
      %191 = vst.msk [vmem:[#allocation9 + $0x8] sm:$0xff] %vm74, %v189
    $region37: #{tpu_custom_call.1} parent=1 // pred_fallthru
      _
    // Predicated region
    $region38: #{tpu_custom_call.1} parent=1 // pred_check
      _
    $region39: #{tpu_custom_call.1} parent=1 // pred_check_branch
      %193 = sbr.rel (0) target = $region41
    $region40: #{tpu_custom_call.1} parent=1 // pred_region
      %s195 = ssub.s32 256, 256
      %196 = vsyncadd [#allocation5], %s195
      %s197 = sshll.u32 [#allocation9], 4
      %s198 = int_to_ptr.vmem [resolvable:$true] %s197
      %203 = dma.vmem_to_hbm [thread:$0]  %s198, 256, %s4, [#allocation5], 128, 128, 8
    $region41: #{tpu_custom_call.1} parent=1 // pred_fallthru
      _
    // Predicated region
    $region42: #{tpu_custom_call.1} parent=1 // pred_check
      _
    $region43: #{tpu_custom_call.1} parent=1 // pred_check_branch
      %205 = sbr.rel (0) target = $region45
    $region44: #{tpu_custom_call.1} parent=1 // pred_region
      %206 = dma.done [#allocation5], 256
    $region45: #{tpu_custom_call.1} parent=1 // pred_fallthru
      _
    %207 = vsyncpa [#allocation4], 1
    %208 = vsyncpa [#allocation7], 1
    %209 = vsyncpa [#allocation5], 1

</llo_original>
